<compile_context>
chip_gen: v6e
topology: v6e:2x2x1
jax: 0.10.0
libtpu: 0.0.40
codegen_flags: <defaults>
</compile_context>

<pallas_src>
import jax
import jax.numpy as jnp
from jax.experimental import pallas as pl
from jax.experimental.pallas import tpu as pltpu

N_IN, H1, H2, N_OUT = 10, 5, 3, 1


def _tree_sum(terms):
    # Pairwise tree reduction: shorter dependency chains -> better VPU ILP.
    while len(terms) > 1:
        nxt = [terms[i] + terms[i + 1] for i in range(0, len(terms) - 1, 2)]
        if len(terms) % 2:
            nxt.append(terms[-1])
        terms = nxt
    return terms[0]


def mlp_kernel(w1_ref, b1_ref, w2_ref, b2_ref, w3_ref, b3_ref, x_ref, o_ref):
    # x_ref: (10, 8, L) feature-major tile, batch on (sublane, lane).
    # o_ref: (1, 8, L).  Weights/biases are SMEM scalars.
    x_rows = [x_ref[k] for k in range(N_IN)]          # each (8, L), full vregs

    # fc1 + ReLU: 10 -> 5
    h1 = []
    for j in range(H1):
        acc = _tree_sum([x_rows[k] * w1_ref[k, j] for k in range(N_IN)])
        h1.append(jnp.maximum(acc + b1_ref[j], 0.0))

    # fc2 + ReLU: 5 -> 3
    h2 = []
    for j in range(H2):
        acc = _tree_sum([h1[k] * w2_ref[k, j] for k in range(H1)])
        h2.append(jnp.maximum(acc + b2_ref[j], 0.0))

    # fc3: 3 -> 1
    acc = _tree_sum([h2[k] * w3_ref[k, 0] for k in range(H2)])
    o_ref[0] = (acc + b3_ref[0]).astype(o_ref.dtype)


def _round_up(v, m):
    return ((v + m - 1) // m) * m


def simple_model_forward(x, params, *, lanes=512):
    """x: (B, 10) float32.  params: w* stored (in, out), b* stored (out,).

    Returns (B, 1) float32, identical semantics to the PyTorch SimpleModel.
    """
    B = x.shape[0]
    assert x.shape[1] == N_IN

    # Lane tile: multiple of 128; clamp for small batches to avoid over-padding.
    lanes = _round_up(lanes, 128)
    lanes = min(lanes, _round_up(pl.cdiv(B, 8), 128))
    per_block = 8 * lanes                       # samples per grid step
    nblk = pl.cdiv(B, per_block)
    Bp = nblk * per_block

    # One-time layout flip in the wrapper: feature-major, batch padded and
    # folded into (nblk*8, lanes) so each kernel tile is (10, 8, lanes).
    xt = jnp.transpose(x.astype(jnp.float32))   # (10, B)
    if Bp != B:
        xt = jnp.pad(xt, ((0, 0), (0, Bp - B)))
    x3 = xt.reshape(N_IN, nblk * 8, lanes)

    smem = pl.BlockSpec(memory_space=pltpu.MemorySpace.SMEM)
    weight_bytes = 4 * (N_IN * H1 + H1 + H1 * H2 + H2 + H2 * N_OUT + N_OUT)

    out3 = pl.pallas_call(
        mlp_kernel,
        out_shape=jax.ShapeDtypeStruct((N_OUT, nblk * 8, lanes), jnp.float32),
        grid=(nblk,),
        in_specs=[
            smem, smem, smem, smem, smem, smem,                       # weights
            pl.BlockSpec((N_IN, 8, lanes), lambda i: (0, i, 0)),      # x tile
        ],
        out_specs=pl.BlockSpec((N_OUT, 8, lanes), lambda i: (0, i, 0)),
        compiler_params=pltpu.CompilerParams(
            dimension_semantics=("parallel",),                        # megacore
        ),
        cost_estimate=pl.CostEstimate(
            flops=2 * Bp * (N_IN * H1 + H1 * H2 + H2 * N_OUT),
            transcendentals=0,
            bytes_accessed=Bp * (N_IN + N_OUT) * 4 + weight_bytes,
        ),
    )(params["w1"], params["b1"], params["w2"], params["b2"],
      params["w3"], params["b3"], x3)

    out = out3.reshape(N_OUT, Bp)[:, :B]        # (1, B), drop padding
    return jnp.transpose(out)                   # (B, 1)


def init_params(key):
    """Deterministic init mimicking PyTorch Linear (U[-1/sqrt(fan_in), +]).

    Weights stored (in, out) so forward is x @ W; biases stored (out,).
    """
    def linear(key, fan_in, fan_out):
        k_w, k_b = jax.random.split(key)
        bound = 1.0 / jnp.sqrt(float(fan_in))
        w = jax.random.uniform(k_w, (fan_in, fan_out), jnp.float32, -bound, bound)
        b = jax.random.uniform(k_b, (fan_out,), jnp.float32, -bound, bound)
        return w, b

    k1, k2, k3 = jax.random.split(key, 3)
    w1, b1 = linear(k1, N_IN, H1)
    w2, b2 = linear(k2, H1, H2)
    w3, b3 = linear(k3, H2, N_OUT)
    return {"w1": w1, "b1": b1, "w2": w2, "b2": b2, "w3": w3, "b3": b3}


def reference_forward(x, p):
    h1 = jnp.maximum(x @ p["w1"] + p["b1"], 0.0)
    h2 = jnp.maximum(h1 @ p["w2"] + p["b2"], 0.0)
    return h2 @ p["w3"] + p["b3"]


if __name__ == "__main__":
    key = jax.random.PRNGKey(0)
    k_params, k_x = jax.random.split(key)
    params = init_params(k_params)

    B = 16                                        # small batch; exercises padding
    x = jax.random.normal(k_x, (B, N_IN), jnp.float32)

    out = simple_model_forward(x, params)
    out = jax.block_until_ready(out)

    ref = reference_forward(x, params)
    assert out.shape == (B, 1), out.shape
    assert jnp.allclose(out, ref, atol=1e-5, rtol=1e-5), \
        float(jnp.max(jnp.abs(out - ref)))
    print("KERNEL_OK")
</pallas_src>

<mosaic_0001>
module attributes {stable_mosaic.version = 11 : i64} {
  func.func @mlp_kernel(%arg0: i32, %arg1: memref<10x5xf32, #tpu.memory_space<smem>>, %arg2: memref<5xf32, #tpu.memory_space<smem>>, %arg3: memref<5x3xf32, #tpu.memory_space<smem>>, %arg4: memref<3xf32, #tpu.memory_space<smem>>, %arg5: memref<3x1xf32, #tpu.memory_space<smem>>, %arg6: memref<1xf32, #tpu.memory_space<smem>>, %arg7: memref<10x8x128xf32, #tpu.memory_space<vmem>>, %arg8: memref<1x8x128xf32, #tpu.memory_space<vmem>>) attributes {dimension_semantics = [#tpu.dimension_semantics<parallel>], iteration_bounds = array<i64: 1>, scalar_prefetch = 0 : i64, scratch_operands = 0 : i64, tpu.core_type = #tpu.core_type<tc>, window_params = [{transform_indices = @transform_0, window_bounds = array<i64: 10, 5>}, {transform_indices = @transform_1, window_bounds = array<i64: 5>}, {transform_indices = @transform_2, window_bounds = array<i64: 5, 3>}, {transform_indices = @transform_3, window_bounds = array<i64: 3>}, {transform_indices = @transform_4, window_bounds = array<i64: 3, 1>}, {transform_indices = @transform_5, window_bounds = array<i64: 1>}, {transform_indices = @transform_6, window_bounds = array<i64: 10, 8, 128>}, {transform_indices = @transform_7, window_bounds = array<i64: 1, 8, 128>}]} {
    %c0 = arith.constant 0 : index
    %c0_0 = arith.constant 0 : index
    %c0_1 = arith.constant 0 : index
    %0 = vector.load %arg7[%c0, %c0_0, %c0_1] : memref<10x8x128xf32, #tpu.memory_space<vmem>>, vector<1x8x128xf32>
    %1 = vector.shape_cast %0 : vector<1x8x128xf32> to vector<8x128xf32>
    %c1 = arith.constant 1 : index
    %c0_2 = arith.constant 0 : index
    %c0_3 = arith.constant 0 : index
    %2 = vector.load %arg7[%c1, %c0_2, %c0_3] : memref<10x8x128xf32, #tpu.memory_space<vmem>>, vector<1x8x128xf32>
    %3 = vector.shape_cast %2 : vector<1x8x128xf32> to vector<8x128xf32>
    %c2 = arith.constant 2 : index
    %c0_4 = arith.constant 0 : index
    %c0_5 = arith.constant 0 : index
    %4 = vector.load %arg7[%c2, %c0_4, %c0_5] : memref<10x8x128xf32, #tpu.memory_space<vmem>>, vector<1x8x128xf32>
    %5 = vector.shape_cast %4 : vector<1x8x128xf32> to vector<8x128xf32>
    %c3 = arith.constant 3 : index
    %c0_6 = arith.constant 0 : index
    %c0_7 = arith.constant 0 : index
    %6 = vector.load %arg7[%c3, %c0_6, %c0_7] : memref<10x8x128xf32, #tpu.memory_space<vmem>>, vector<1x8x128xf32>
    %7 = vector.shape_cast %6 : vector<1x8x128xf32> to vector<8x128xf32>
    %c4 = arith.constant 4 : index
    %c0_8 = arith.constant 0 : index
    %c0_9 = arith.constant 0 : index
    %8 = vector.load %arg7[%c4, %c0_8, %c0_9] : memref<10x8x128xf32, #tpu.memory_space<vmem>>, vector<1x8x128xf32>
    %9 = vector.shape_cast %8 : vector<1x8x128xf32> to vector<8x128xf32>
    %c5 = arith.constant 5 : index
    %c0_10 = arith.constant 0 : index
    %c0_11 = arith.constant 0 : index
    %10 = vector.load %arg7[%c5, %c0_10, %c0_11] : memref<10x8x128xf32, #tpu.memory_space<vmem>>, vector<1x8x128xf32>
    %11 = vector.shape_cast %10 : vector<1x8x128xf32> to vector<8x128xf32>
    %c6 = arith.constant 6 : index
    %c0_12 = arith.constant 0 : index
    %c0_13 = arith.constant 0 : index
    %12 = vector.load %arg7[%c6, %c0_12, %c0_13] : memref<10x8x128xf32, #tpu.memory_space<vmem>>, vector<1x8x128xf32>
    %13 = vector.shape_cast %12 : vector<1x8x128xf32> to vector<8x128xf32>
    %c7 = arith.constant 7 : index
    %c0_14 = arith.constant 0 : index
    %c0_15 = arith.constant 0 : index
    %14 = vector.load %arg7[%c7, %c0_14, %c0_15] : memref<10x8x128xf32, #tpu.memory_space<vmem>>, vector<1x8x128xf32>
    %15 = vector.shape_cast %14 : vector<1x8x128xf32> to vector<8x128xf32>
    %c8 = arith.constant 8 : index
    %c0_16 = arith.constant 0 : index
    %c0_17 = arith.constant 0 : index
    %16 = vector.load %arg7[%c8, %c0_16, %c0_17] : memref<10x8x128xf32, #tpu.memory_space<vmem>>, vector<1x8x128xf32>
    %17 = vector.shape_cast %16 : vector<1x8x128xf32> to vector<8x128xf32>
    %c9 = arith.constant 9 : index
    %c0_18 = arith.constant 0 : index
    %c0_19 = arith.constant 0 : index
    %18 = vector.load %arg7[%c9, %c0_18, %c0_19] : memref<10x8x128xf32, #tpu.memory_space<vmem>>, vector<1x8x128xf32>
    %19 = vector.shape_cast %18 : vector<1x8x128xf32> to vector<8x128xf32>
    %c0_20 = arith.constant 0 : index
    %c0_21 = arith.constant 0 : index
    %20 = memref.load %arg1[%c0_20, %c0_21] : memref<10x5xf32, #tpu.memory_space<smem>>
    %21 = vector.broadcast %20 : f32 to vector<8x128xf32>
    %22 = arith.mulf %1, %21 : vector<8x128xf32>
    %c1_22 = arith.constant 1 : index
    %c0_23 = arith.constant 0 : index
    %23 = memref.load %arg1[%c1_22, %c0_23] : memref<10x5xf32, #tpu.memory_space<smem>>
    %24 = vector.broadcast %23 : f32 to vector<8x128xf32>
    %25 = arith.mulf %3, %24 : vector<8x128xf32>
    %c2_24 = arith.constant 2 : index
    %c0_25 = arith.constant 0 : index
    %26 = memref.load %arg1[%c2_24, %c0_25] : memref<10x5xf32, #tpu.memory_space<smem>>
    %27 = vector.broadcast %26 : f32 to vector<8x128xf32>
    %28 = arith.mulf %5, %27 : vector<8x128xf32>
    %c3_26 = arith.constant 3 : index
    %c0_27 = arith.constant 0 : index
    %29 = memref.load %arg1[%c3_26, %c0_27] : memref<10x5xf32, #tpu.memory_space<smem>>
    %30 = vector.broadcast %29 : f32 to vector<8x128xf32>
    %31 = arith.mulf %7, %30 : vector<8x128xf32>
    %c4_28 = arith.constant 4 : index
    %c0_29 = arith.constant 0 : index
    %32 = memref.load %arg1[%c4_28, %c0_29] : memref<10x5xf32, #tpu.memory_space<smem>>
    %33 = vector.broadcast %32 : f32 to vector<8x128xf32>
    %34 = arith.mulf %9, %33 : vector<8x128xf32>
    %c5_30 = arith.constant 5 : index
    %c0_31 = arith.constant 0 : index
    %35 = memref.load %arg1[%c5_30, %c0_31] : memref<10x5xf32, #tpu.memory_space<smem>>
    %36 = vector.broadcast %35 : f32 to vector<8x128xf32>
    %37 = arith.mulf %11, %36 : vector<8x128xf32>
    %c6_32 = arith.constant 6 : index
    %c0_33 = arith.constant 0 : index
    %38 = memref.load %arg1[%c6_32, %c0_33] : memref<10x5xf32, #tpu.memory_space<smem>>
    %39 = vector.broadcast %38 : f32 to vector<8x128xf32>
    %40 = arith.mulf %13, %39 : vector<8x128xf32>
    %c7_34 = arith.constant 7 : index
    %c0_35 = arith.constant 0 : index
    %41 = memref.load %arg1[%c7_34, %c0_35] : memref<10x5xf32, #tpu.memory_space<smem>>
    %42 = vector.broadcast %41 : f32 to vector<8x128xf32>
    %43 = arith.mulf %15, %42 : vector<8x128xf32>
    %c8_36 = arith.constant 8 : index
    %c0_37 = arith.constant 0 : index
    %44 = memref.load %arg1[%c8_36, %c0_37] : memref<10x5xf32, #tpu.memory_space<smem>>
    %45 = vector.broadcast %44 : f32 to vector<8x128xf32>
    %46 = arith.mulf %17, %45 : vector<8x128xf32>
    %c9_38 = arith.constant 9 : index
    %c0_39 = arith.constant 0 : index
    %47 = memref.load %arg1[%c9_38, %c0_39] : memref<10x5xf32, #tpu.memory_space<smem>>
    %48 = vector.broadcast %47 : f32 to vector<8x128xf32>
    %49 = arith.mulf %19, %48 : vector<8x128xf32>
    %50 = arith.addf %22, %25 : vector<8x128xf32>
    %51 = arith.addf %28, %31 : vector<8x128xf32>
    %52 = arith.addf %34, %37 : vector<8x128xf32>
    %53 = arith.addf %40, %43 : vector<8x128xf32>
    %54 = arith.addf %46, %49 : vector<8x128xf32>
    %55 = arith.addf %50, %51 : vector<8x128xf32>
    %56 = arith.addf %52, %53 : vector<8x128xf32>
    %57 = arith.addf %55, %56 : vector<8x128xf32>
    %58 = arith.addf %57, %54 : vector<8x128xf32>
    %c0_40 = arith.constant 0 : index
    %59 = memref.load %arg2[%c0_40] : memref<5xf32, #tpu.memory_space<smem>>
    %60 = vector.broadcast %59 : f32 to vector<8x128xf32>
    %61 = arith.addf %58, %60 : vector<8x128xf32>
    %cst = arith.constant 0.000000e+00 : f32
    %62 = vector.broadcast %cst : f32 to vector<8x128xf32>
    %63 = arith.maximumf %61, %62 : vector<8x128xf32>
    %c0_41 = arith.constant 0 : index
    %c1_42 = arith.constant 1 : index
    %64 = memref.load %arg1[%c0_41, %c1_42] : memref<10x5xf32, #tpu.memory_space<smem>>
    %65 = vector.broadcast %64 : f32 to vector<8x128xf32>
    %66 = arith.mulf %1, %65 : vector<8x128xf32>
    %c1_43 = arith.constant 1 : index
    %c1_44 = arith.constant 1 : index
    %67 = memref.load %arg1[%c1_43, %c1_44] : memref<10x5xf32, #tpu.memory_space<smem>>
    %68 = vector.broadcast %67 : f32 to vector<8x128xf32>
    %69 = arith.mulf %3, %68 : vector<8x128xf32>
    %c2_45 = arith.constant 2 : index
    %c1_46 = arith.constant 1 : index
    %70 = memref.load %arg1[%c2_45, %c1_46] : memref<10x5xf32, #tpu.memory_space<smem>>
    %71 = vector.broadcast %70 : f32 to vector<8x128xf32>
    %72 = arith.mulf %5, %71 : vector<8x128xf32>
    %c3_47 = arith.constant 3 : index
    %c1_48 = arith.constant 1 : index
    %73 = memref.load %arg1[%c3_47, %c1_48] : memref<10x5xf32, #tpu.memory_space<smem>>
    %74 = vector.broadcast %73 : f32 to vector<8x128xf32>
    %75 = arith.mulf %7, %74 : vector<8x128xf32>
    %c4_49 = arith.constant 4 : index
    %c1_50 = arith.constant 1 : index
    %76 = memref.load %arg1[%c4_49, %c1_50] : memref<10x5xf32, #tpu.memory_space<smem>>
    %77 = vector.broadcast %76 : f32 to vector<8x128xf32>
    %78 = arith.mulf %9, %77 : vector<8x128xf32>
    %c5_51 = arith.constant 5 : index
    %c1_52 = arith.constant 1 : index
    %79 = memref.load %arg1[%c5_51, %c1_52] : memref<10x5xf32, #tpu.memory_space<smem>>
    %80 = vector.broadcast %79 : f32 to vector<8x128xf32>
    %81 = arith.mulf %11, %80 : vector<8x128xf32>
    %c6_53 = arith.constant 6 : index
    %c1_54 = arith.constant 1 : index
    %82 = memref.load %arg1[%c6_53, %c1_54] : memref<10x5xf32, #tpu.memory_space<smem>>
    %83 = vector.broadcast %82 : f32 to vector<8x128xf32>
    %84 = arith.mulf %13, %83 : vector<8x128xf32>
    %c7_55 = arith.constant 7 : index
    %c1_56 = arith.constant 1 : index
    %85 = memref.load %arg1[%c7_55, %c1_56] : memref<10x5xf32, #tpu.memory_space<smem>>
    %86 = vector.broadcast %85 : f32 to vector<8x128xf32>
    %87 = arith.mulf %15, %86 : vector<8x128xf32>
    %c8_57 = arith.constant 8 : index
    %c1_58 = arith.constant 1 : index
    %88 = memref.load %arg1[%c8_57, %c1_58] : memref<10x5xf32, #tpu.memory_space<smem>>
    %89 = vector.broadcast %88 : f32 to vector<8x128xf32>
    %90 = arith.mulf %17, %89 : vector<8x128xf32>
    %c9_59 = arith.constant 9 : index
    %c1_60 = arith.constant 1 : index
    %91 = memref.load %arg1[%c9_59, %c1_60] : memref<10x5xf32, #tpu.memory_space<smem>>
    %92 = vector.broadcast %91 : f32 to vector<8x128xf32>
    %93 = arith.mulf %19, %92 : vector<8x128xf32>
    %94 = arith.addf %66, %69 : vector<8x128xf32>
    %95 = arith.addf %72, %75 : vector<8x128xf32>
    %96 = arith.addf %78, %81 : vector<8x128xf32>
    %97 = arith.addf %84, %87 : vector<8x128xf32>
    %98 = arith.addf %90, %93 : vector<8x128xf32>
    %99 = arith.addf %94, %95 : vector<8x128xf32>
    %100 = arith.addf %96, %97 : vector<8x128xf32>
    %101 = arith.addf %99, %100 : vector<8x128xf32>
    %102 = arith.addf %101, %98 : vector<8x128xf32>
    %c1_61 = arith.constant 1 : index
    %103 = memref.load %arg2[%c1_61] : memref<5xf32, #tpu.memory_space<smem>>
    %104 = vector.broadcast %103 : f32 to vector<8x128xf32>
    %105 = arith.addf %102, %104 : vector<8x128xf32>
    %cst_62 = arith.constant 0.000000e+00 : f32
    %106 = vector.broadcast %cst_62 : f32 to vector<8x128xf32>
    %107 = arith.maximumf %105, %106 : vector<8x128xf32>
    %c0_63 = arith.constant 0 : index
    %c2_64 = arith.constant 2 : index
    %108 = memref.load %arg1[%c0_63, %c2_64] : memref<10x5xf32, #tpu.memory_space<smem>>
    %109 = vector.broadcast %108 : f32 to vector<8x128xf32>
    %110 = arith.mulf %1, %109 : vector<8x128xf32>
    %c1_65 = arith.constant 1 : index
    %c2_66 = arith.constant 2 : index
    %111 = memref.load %arg1[%c1_65, %c2_66] : memref<10x5xf32, #tpu.memory_space<smem>>
    %112 = vector.broadcast %111 : f32 to vector<8x128xf32>
    %113 = arith.mulf %3, %112 : vector<8x128xf32>
    %c2_67 = arith.constant 2 : index
    %c2_68 = arith.constant 2 : index
    %114 = memref.load %arg1[%c2_67, %c2_68] : memref<10x5xf32, #tpu.memory_space<smem>>
    %115 = vector.broadcast %114 : f32 to vector<8x128xf32>
    %116 = arith.mulf %5, %115 : vector<8x128xf32>
    %c3_69 = arith.constant 3 : index
    %c2_70 = arith.constant 2 : index
    %117 = memref.load %arg1[%c3_69, %c2_70] : memref<10x5xf32, #tpu.memory_space<smem>>
    %118 = vector.broadcast %117 : f32 to vector<8x128xf32>
    %119 = arith.mulf %7, %118 : vector<8x128xf32>
    %c4_71 = arith.constant 4 : index
    %c2_72 = arith.constant 2 : index
    %120 = memref.load %arg1[%c4_71, %c2_72] : memref<10x5xf32, #tpu.memory_space<smem>>
    %121 = vector.broadcast %120 : f32 to vector<8x128xf32>
    %122 = arith.mulf %9, %121 : vector<8x128xf32>
    %c5_73 = arith.constant 5 : index
    %c2_74 = arith.constant 2 : index
    %123 = memref.load %arg1[%c5_73, %c2_74] : memref<10x5xf32, #tpu.memory_space<smem>>
    %124 = vector.broadcast %123 : f32 to vector<8x128xf32>
    %125 = arith.mulf %11, %124 : vector<8x128xf32>
    %c6_75 = arith.constant 6 : index
    %c2_76 = arith.constant 2 : index
    %126 = memref.load %arg1[%c6_75, %c2_76] : memref<10x5xf32, #tpu.memory_space<smem>>
    %127 = vector.broadcast %126 : f32 to vector<8x128xf32>
    %128 = arith.mulf %13, %127 : vector<8x128xf32>
    %c7_77 = arith.constant 7 : index
    %c2_78 = arith.constant 2 : index
    %129 = memref.load %arg1[%c7_77, %c2_78] : memref<10x5xf32, #tpu.memory_space<smem>>
    %130 = vector.broadcast %129 : f32 to vector<8x128xf32>
    %131 = arith.mulf %15, %130 : vector<8x128xf32>
    %c8_79 = arith.constant 8 : index
    %c2_80 = arith.constant 2 : index
    %132 = memref.load %arg1[%c8_79, %c2_80] : memref<10x5xf32, #tpu.memory_space<smem>>
    %133 = vector.broadcast %132 : f32 to vector<8x128xf32>
    %134 = arith.mulf %17, %133 : vector<8x128xf32>
    %c9_81 = arith.constant 9 : index
    %c2_82 = arith.constant 2 : index
    %135 = memref.load %arg1[%c9_81, %c2_82] : memref<10x5xf32, #tpu.memory_space<smem>>
    %136 = vector.broadcast %135 : f32 to vector<8x128xf32>
    %137 = arith.mulf %19, %136 : vector<8x128xf32>
    %138 = arith.addf %110, %113 : vector<8x128xf32>
    %139 = arith.addf %116, %119 : vector<8x128xf32>
    %140 = arith.addf %122, %125 : vector<8x128xf32>
    %141 = arith.addf %128, %131 : vector<8x128xf32>
    %142 = arith.addf %134, %137 : vector<8x128xf32>
    %143 = arith.addf %138, %139 : vector<8x128xf32>
    %144 = arith.addf %140, %141 : vector<8x128xf32>
    %145 = arith.addf %143, %144 : vector<8x128xf32>
    %146 = arith.addf %145, %142 : vector<8x128xf32>
    %c2_83 = arith.constant 2 : index
    %147 = memref.load %arg2[%c2_83] : memref<5xf32, #tpu.memory_space<smem>>
    %148 = vector.broadcast %147 : f32 to vector<8x128xf32>
    %149 = arith.addf %146, %148 : vector<8x128xf32>
    %cst_84 = arith.constant 0.000000e+00 : f32
    %150 = vector.broadcast %cst_84 : f32 to vector<8x128xf32>
    %151 = arith.maximumf %149, %150 : vector<8x128xf32>
    %c0_85 = arith.constant 0 : index
    %c3_86 = arith.constant 3 : index
    %152 = memref.load %arg1[%c0_85, %c3_86] : memref<10x5xf32, #tpu.memory_space<smem>>
    %153 = vector.broadcast %152 : f32 to vector<8x128xf32>
    %154 = arith.mulf %1, %153 : vector<8x128xf32>
    %c1_87 = arith.constant 1 : index
    %c3_88 = arith.constant 3 : index
    %155 = memref.load %arg1[%c1_87, %c3_88] : memref<10x5xf32, #tpu.memory_space<smem>>
    %156 = vector.broadcast %155 : f32 to vector<8x128xf32>
    %157 = arith.mulf %3, %156 : vector<8x128xf32>
    %c2_89 = arith.constant 2 : index
    %c3_90 = arith.constant 3 : index
    %158 = memref.load %arg1[%c2_89, %c3_90] : memref<10x5xf32, #tpu.memory_space<smem>>
    %159 = vector.broadcast %158 : f32 to vector<8x128xf32>
    %160 = arith.mulf %5, %159 : vector<8x128xf32>
    %c3_91 = arith.constant 3 : index
    %c3_92 = arith.constant 3 : index
    %161 = memref.load %arg1[%c3_91, %c3_92] : memref<10x5xf32, #tpu.memory_space<smem>>
    %162 = vector.broadcast %161 : f32 to vector<8x128xf32>
    %163 = arith.mulf %7, %162 : vector<8x128xf32>
    %c4_93 = arith.constant 4 : index
    %c3_94 = arith.constant 3 : index
    %164 = memref.load %arg1[%c4_93, %c3_94] : memref<10x5xf32, #tpu.memory_space<smem>>
    %165 = vector.broadcast %164 : f32 to vector<8x128xf32>
    %166 = arith.mulf %9, %165 : vector<8x128xf32>
    %c5_95 = arith.constant 5 : index
    %c3_96 = arith.constant 3 : index
    %167 = memref.load %arg1[%c5_95, %c3_96] : memref<10x5xf32, #tpu.memory_space<smem>>
    %168 = vector.broadcast %167 : f32 to vector<8x128xf32>
    %169 = arith.mulf %11, %168 : vector<8x128xf32>
    %c6_97 = arith.constant 6 : index
    %c3_98 = arith.constant 3 : index
    %170 = memref.load %arg1[%c6_97, %c3_98] : memref<10x5xf32, #tpu.memory_space<smem>>
    %171 = vector.broadcast %170 : f32 to vector<8x128xf32>
    %172 = arith.mulf %13, %171 : vector<8x128xf32>
    %c7_99 = arith.constant 7 : index
    %c3_100 = arith.constant 3 : index
    %173 = memref.load %arg1[%c7_99, %c3_100] : memref<10x5xf32, #tpu.memory_space<smem>>
    %174 = vector.broadcast %173 : f32 to vector<8x128xf32>
    %175 = arith.mulf %15, %174 : vector<8x128xf32>
    %c8_101 = arith.constant 8 : index
    %c3_102 = arith.constant 3 : index
    %176 = memref.load %arg1[%c8_101, %c3_102] : memref<10x5xf32, #tpu.memory_space<smem>>
    %177 = vector.broadcast %176 : f32 to vector<8x128xf32>
    %178 = arith.mulf %17, %177 : vector<8x128xf32>
    %c9_103 = arith.constant 9 : index
    %c3_104 = arith.constant 3 : index
    %179 = memref.load %arg1[%c9_103, %c3_104] : memref<10x5xf32, #tpu.memory_space<smem>>
    %180 = vector.broadcast %179 : f32 to vector<8x128xf32>
    %181 = arith.mulf %19, %180 : vector<8x128xf32>
    %182 = arith.addf %154, %157 : vector<8x128xf32>
    %183 = arith.addf %160, %163 : vector<8x128xf32>
    %184 = arith.addf %166, %169 : vector<8x128xf32>
    %185 = arith.addf %172, %175 : vector<8x128xf32>
    %186 = arith.addf %178, %181 : vector<8x128xf32>
    %187 = arith.addf %182, %183 : vector<8x128xf32>
    %188 = arith.addf %184, %185 : vector<8x128xf32>
    %189 = arith.addf %187, %188 : vector<8x128xf32>
    %190 = arith.addf %189, %186 : vector<8x128xf32>
    %c3_105 = arith.constant 3 : index
    %191 = memref.load %arg2[%c3_105] : memref<5xf32, #tpu.memory_space<smem>>
    %192 = vector.broadcast %191 : f32 to vector<8x128xf32>
    %193 = arith.addf %190, %192 : vector<8x128xf32>
    %cst_106 = arith.constant 0.000000e+00 : f32
    %194 = vector.broadcast %cst_106 : f32 to vector<8x128xf32>
    %195 = arith.maximumf %193, %194 : vector<8x128xf32>
    %c0_107 = arith.constant 0 : index
    %c4_108 = arith.constant 4 : index
    %196 = memref.load %arg1[%c0_107, %c4_108] : memref<10x5xf32, #tpu.memory_space<smem>>
    %197 = vector.broadcast %196 : f32 to vector<8x128xf32>
    %198 = arith.mulf %1, %197 : vector<8x128xf32>
    %c1_109 = arith.constant 1 : index
    %c4_110 = arith.constant 4 : index
    %199 = memref.load %arg1[%c1_109, %c4_110] : memref<10x5xf32, #tpu.memory_space<smem>>
    %200 = vector.broadcast %199 : f32 to vector<8x128xf32>
    %201 = arith.mulf %3, %200 : vector<8x128xf32>
    %c2_111 = arith.constant 2 : index
    %c4_112 = arith.constant 4 : index
    %202 = memref.load %arg1[%c2_111, %c4_112] : memref<10x5xf32, #tpu.memory_space<smem>>
    %203 = vector.broadcast %202 : f32 to vector<8x128xf32>
    %204 = arith.mulf %5, %203 : vector<8x128xf32>
    %c3_113 = arith.constant 3 : index
    %c4_114 = arith.constant 4 : index
    %205 = memref.load %arg1[%c3_113, %c4_114] : memref<10x5xf32, #tpu.memory_space<smem>>
    %206 = vector.broadcast %205 : f32 to vector<8x128xf32>
    %207 = arith.mulf %7, %206 : vector<8x128xf32>
    %c4_115 = arith.constant 4 : index
    %c4_116 = arith.constant 4 : index
    %208 = memref.load %arg1[%c4_115, %c4_116] : memref<10x5xf32, #tpu.memory_space<smem>>
    %209 = vector.broadcast %208 : f32 to vector<8x128xf32>
    %210 = arith.mulf %9, %209 : vector<8x128xf32>
    %c5_117 = arith.constant 5 : index
    %c4_118 = arith.constant 4 : index
    %211 = memref.load %arg1[%c5_117, %c4_118] : memref<10x5xf32, #tpu.memory_space<smem>>
    %212 = vector.broadcast %211 : f32 to vector<8x128xf32>
    %213 = arith.mulf %11, %212 : vector<8x128xf32>
    %c6_119 = arith.constant 6 : index
    %c4_120 = arith.constant 4 : index
    %214 = memref.load %arg1[%c6_119, %c4_120] : memref<10x5xf32, #tpu.memory_space<smem>>
    %215 = vector.broadcast %214 : f32 to vector<8x128xf32>
    %216 = arith.mulf %13, %215 : vector<8x128xf32>
    %c7_121 = arith.constant 7 : index
    %c4_122 = arith.constant 4 : index
    %217 = memref.load %arg1[%c7_121, %c4_122] : memref<10x5xf32, #tpu.memory_space<smem>>
    %218 = vector.broadcast %217 : f32 to vector<8x128xf32>
    %219 = arith.mulf %15, %218 : vector<8x128xf32>
    %c8_123 = arith.constant 8 : index
    %c4_124 = arith.constant 4 : index
    %220 = memref.load %arg1[%c8_123, %c4_124] : memref<10x5xf32, #tpu.memory_space<smem>>
    %221 = vector.broadcast %220 : f32 to vector<8x128xf32>
    %222 = arith.mulf %17, %221 : vector<8x128xf32>
    %c9_125 = arith.constant 9 : index
    %c4_126 = arith.constant 4 : index
    %223 = memref.load %arg1[%c9_125, %c4_126] : memref<10x5xf32, #tpu.memory_space<smem>>
    %224 = vector.broadcast %223 : f32 to vector<8x128xf32>
    %225 = arith.mulf %19, %224 : vector<8x128xf32>
    %226 = arith.addf %198, %201 : vector<8x128xf32>
    %227 = arith.addf %204, %207 : vector<8x128xf32>
    %228 = arith.addf %210, %213 : vector<8x128xf32>
    %229 = arith.addf %216, %219 : vector<8x128xf32>
    %230 = arith.addf %222, %225 : vector<8x128xf32>
    %231 = arith.addf %226, %227 : vector<8x128xf32>
    %232 = arith.addf %228, %229 : vector<8x128xf32>
    %233 = arith.addf %231, %232 : vector<8x128xf32>
    %234 = arith.addf %233, %230 : vector<8x128xf32>
    %c4_127 = arith.constant 4 : index
    %235 = memref.load %arg2[%c4_127] : memref<5xf32, #tpu.memory_space<smem>>
    %236 = vector.broadcast %235 : f32 to vector<8x128xf32>
    %237 = arith.addf %234, %236 : vector<8x128xf32>
    %cst_128 = arith.constant 0.000000e+00 : f32
    %238 = vector.broadcast %cst_128 : f32 to vector<8x128xf32>
    %239 = arith.maximumf %237, %238 : vector<8x128xf32>
    %c0_129 = arith.constant 0 : index
    %c0_130 = arith.constant 0 : index
    %240 = memref.load %arg3[%c0_129, %c0_130] : memref<5x3xf32, #tpu.memory_space<smem>>
    %241 = vector.broadcast %240 : f32 to vector<8x128xf32>
    %242 = arith.mulf %63, %241 : vector<8x128xf32>
    %c1_131 = arith.constant 1 : index
    %c0_132 = arith.constant 0 : index
    %243 = memref.load %arg3[%c1_131, %c0_132] : memref<5x3xf32, #tpu.memory_space<smem>>
    %244 = vector.broadcast %243 : f32 to vector<8x128xf32>
    %245 = arith.mulf %107, %244 : vector<8x128xf32>
    %c2_133 = arith.constant 2 : index
    %c0_134 = arith.constant 0 : index
    %246 = memref.load %arg3[%c2_133, %c0_134] : memref<5x3xf32, #tpu.memory_space<smem>>
    %247 = vector.broadcast %246 : f32 to vector<8x128xf32>
    %248 = arith.mulf %151, %247 : vector<8x128xf32>
    %c3_135 = arith.constant 3 : index
    %c0_136 = arith.constant 0 : index
    %249 = memref.load %arg3[%c3_135, %c0_136] : memref<5x3xf32, #tpu.memory_space<smem>>
    %250 = vector.broadcast %249 : f32 to vector<8x128xf32>
    %251 = arith.mulf %195, %250 : vector<8x128xf32>
    %c4_137 = arith.constant 4 : index
    %c0_138 = arith.constant 0 : index
    %252 = memref.load %arg3[%c4_137, %c0_138] : memref<5x3xf32, #tpu.memory_space<smem>>
    %253 = vector.broadcast %252 : f32 to vector<8x128xf32>
    %254 = arith.mulf %239, %253 : vector<8x128xf32>
    %255 = arith.addf %242, %245 : vector<8x128xf32>
    %256 = arith.addf %248, %251 : vector<8x128xf32>
    %257 = arith.addf %255, %256 : vector<8x128xf32>
    %258 = arith.addf %257, %254 : vector<8x128xf32>
    %c0_139 = arith.constant 0 : index
    %259 = memref.load %arg4[%c0_139] : memref<3xf32, #tpu.memory_space<smem>>
    %260 = vector.broadcast %259 : f32 to vector<8x128xf32>
    %261 = arith.addf %258, %260 : vector<8x128xf32>
    %cst_140 = arith.constant 0.000000e+00 : f32
    %262 = vector.broadcast %cst_140 : f32 to vector<8x128xf32>
    %263 = arith.maximumf %261, %262 : vector<8x128xf32>
    %c0_141 = arith.constant 0 : index
    %c1_142 = arith.constant 1 : index
    %264 = memref.load %arg3[%c0_141, %c1_142] : memref<5x3xf32, #tpu.memory_space<smem>>
    %265 = vector.broadcast %264 : f32 to vector<8x128xf32>
    %266 = arith.mulf %63, %265 : vector<8x128xf32>
    %c1_143 = arith.constant 1 : index
    %c1_144 = arith.constant 1 : index
    %267 = memref.load %arg3[%c1_143, %c1_144] : memref<5x3xf32, #tpu.memory_space<smem>>
    %268 = vector.broadcast %267 : f32 to vector<8x128xf32>
    %269 = arith.mulf %107, %268 : vector<8x128xf32>
    %c2_145 = arith.constant 2 : index
    %c1_146 = arith.constant 1 : index
    %270 = memref.load %arg3[%c2_145, %c1_146] : memref<5x3xf32, #tpu.memory_space<smem>>
    %271 = vector.broadcast %270 : f32 to vector<8x128xf32>
    %272 = arith.mulf %151, %271 : vector<8x128xf32>
    %c3_147 = arith.constant 3 : index
    %c1_148 = arith.constant 1 : index
    %273 = memref.load %arg3[%c3_147, %c1_148] : memref<5x3xf32, #tpu.memory_space<smem>>
    %274 = vector.broadcast %273 : f32 to vector<8x128xf32>
    %275 = arith.mulf %195, %274 : vector<8x128xf32>
    %c4_149 = arith.constant 4 : index
    %c1_150 = arith.constant 1 : index
    %276 = memref.load %arg3[%c4_149, %c1_150] : memref<5x3xf32, #tpu.memory_space<smem>>
    %277 = vector.broadcast %276 : f32 to vector<8x128xf32>
    %278 = arith.mulf %239, %277 : vector<8x128xf32>
    %279 = arith.addf %266, %269 : vector<8x128xf32>
    %280 = arith.addf %272, %275 : vector<8x128xf32>
    %281 = arith.addf %279, %280 : vector<8x128xf32>
    %282 = arith.addf %281, %278 : vector<8x128xf32>
    %c1_151 = arith.constant 1 : index
    %283 = memref.load %arg4[%c1_151] : memref<3xf32, #tpu.memory_space<smem>>
    %284 = vector.broadcast %283 : f32 to vector<8x128xf32>
    %285 = arith.addf %282, %284 : vector<8x128xf32>
    %cst_152 = arith.constant 0.000000e+00 : f32
    %286 = vector.broadcast %cst_152 : f32 to vector<8x128xf32>
    %287 = arith.maximumf %285, %286 : vector<8x128xf32>
    %c0_153 = arith.constant 0 : index
    %c2_154 = arith.constant 2 : index
    %288 = memref.load %arg3[%c0_153, %c2_154] : memref<5x3xf32, #tpu.memory_space<smem>>
    %289 = vector.broadcast %288 : f32 to vector<8x128xf32>
    %290 = arith.mulf %63, %289 : vector<8x128xf32>
    %c1_155 = arith.constant 1 : index
    %c2_156 = arith.constant 2 : index
    %291 = memref.load %arg3[%c1_155, %c2_156] : memref<5x3xf32, #tpu.memory_space<smem>>
    %292 = vector.broadcast %291 : f32 to vector<8x128xf32>
    %293 = arith.mulf %107, %292 : vector<8x128xf32>
    %c2_157 = arith.constant 2 : index
    %c2_158 = arith.constant 2 : index
    %294 = memref.load %arg3[%c2_157, %c2_158] : memref<5x3xf32, #tpu.memory_space<smem>>
    %295 = vector.broadcast %294 : f32 to vector<8x128xf32>
    %296 = arith.mulf %151, %295 : vector<8x128xf32>
    %c3_159 = arith.constant 3 : index
    %c2_160 = arith.constant 2 : index
    %297 = memref.load %arg3[%c3_159, %c2_160] : memref<5x3xf32, #tpu.memory_space<smem>>
    %298 = vector.broadcast %297 : f32 to vector<8x128xf32>
    %299 = arith.mulf %195, %298 : vector<8x128xf32>
    %c4_161 = arith.constant 4 : index
    %c2_162 = arith.constant 2 : index
    %300 = memref.load %arg3[%c4_161, %c2_162] : memref<5x3xf32, #tpu.memory_space<smem>>
    %301 = vector.broadcast %300 : f32 to vector<8x128xf32>
    %302 = arith.mulf %239, %301 : vector<8x128xf32>
    %303 = arith.addf %290, %293 : vector<8x128xf32>
    %304 = arith.addf %296, %299 : vector<8x128xf32>
    %305 = arith.addf %303, %304 : vector<8x128xf32>
    %306 = arith.addf %305, %302 : vector<8x128xf32>
    %c2_163 = arith.constant 2 : index
    %307 = memref.load %arg4[%c2_163] : memref<3xf32, #tpu.memory_space<smem>>
    %308 = vector.broadcast %307 : f32 to vector<8x128xf32>
    %309 = arith.addf %306, %308 : vector<8x128xf32>
    %cst_164 = arith.constant 0.000000e+00 : f32
    %310 = vector.broadcast %cst_164 : f32 to vector<8x128xf32>
    %311 = arith.maximumf %309, %310 : vector<8x128xf32>
    %c0_165 = arith.constant 0 : index
    %c0_166 = arith.constant 0 : index
    %312 = memref.load %arg5[%c0_165, %c0_166] : memref<3x1xf32, #tpu.memory_space<smem>>
    %313 = vector.broadcast %312 : f32 to vector<8x128xf32>
    %314 = arith.mulf %263, %313 : vector<8x128xf32>
    %c1_167 = arith.constant 1 : index
    %c0_168 = arith.constant 0 : index
    %315 = memref.load %arg5[%c1_167, %c0_168] : memref<3x1xf32, #tpu.memory_space<smem>>
    %316 = vector.broadcast %315 : f32 to vector<8x128xf32>
    %317 = arith.mulf %287, %316 : vector<8x128xf32>
    %c2_169 = arith.constant 2 : index
    %c0_170 = arith.constant 0 : index
    %318 = memref.load %arg5[%c2_169, %c0_170] : memref<3x1xf32, #tpu.memory_space<smem>>
    %319 = vector.broadcast %318 : f32 to vector<8x128xf32>
    %320 = arith.mulf %311, %319 : vector<8x128xf32>
    %321 = arith.addf %314, %317 : vector<8x128xf32>
    %322 = arith.addf %321, %320 : vector<8x128xf32>
    %c0_171 = arith.constant 0 : index
    %323 = memref.load %arg6[%c0_171] : memref<1xf32, #tpu.memory_space<smem>>
    %324 = vector.broadcast %323 : f32 to vector<8x128xf32>
    %325 = arith.addf %322, %324 : vector<8x128xf32>
    %c0_172 = arith.constant 0 : index
    %c0_173 = arith.constant 0 : index
    %c0_174 = arith.constant 0 : index
    %326 = vector.load %arg8[%c0_172, %c0_173, %c0_174] : memref<1x8x128xf32, #tpu.memory_space<vmem>>, vector<1x8x128xf32>
    %327 = vector.shape_cast %326 : vector<1x8x128xf32> to vector<8x128xf32>
    %328 = vector.shape_cast %325 : vector<8x128xf32> to vector<1x8x128xf32>
    tpu.vector_store %arg8[%c0_172, %c0_173, %c0_174], %328 {strides = array<i32>} : memref<1x8x128xf32, #tpu.memory_space<vmem>>, vector<1x8x128xf32>,
    return
  }
  func.func @transform_0(%arg0: i32) -> (i32, i32) {
    %c0_i32 = arith.constant 0 : i32
    %c0_i32_0 = arith.constant 0 : i32
    %c0_i32_1 = arith.constant 0 : i32
    return %c0_i32, %c0_i32_0 : i32, i32
  }
  func.func @transform_1(%arg0: i32) -> i32 {
    %c0_i32 = arith.constant 0 : i32
    %c0_i32_0 = arith.constant 0 : i32
    return %c0_i32 : i32
  }
  func.func @transform_2(%arg0: i32) -> (i32, i32) {
    %c0_i32 = arith.constant 0 : i32
    %c0_i32_0 = arith.constant 0 : i32
    %c0_i32_1 = arith.constant 0 : i32
    return %c0_i32, %c0_i32_0 : i32, i32
  }
  func.func @transform_3(%arg0: i32) -> i32 {
    %c0_i32 = arith.constant 0 : i32
    %c0_i32_0 = arith.constant 0 : i32
    return %c0_i32 : i32
  }
  func.func @transform_4(%arg0: i32) -> (i32, i32) {
    %c0_i32 = arith.constant 0 : i32
    %c0_i32_0 = arith.constant 0 : i32
    %c0_i32_1 = arith.constant 0 : i32
    return %c0_i32, %c0_i32_0 : i32, i32
  }
  func.func @transform_5(%arg0: i32) -> i32 {
    %c0_i32 = arith.constant 0 : i32
    %c0_i32_0 = arith.constant 0 : i32
    return %c0_i32 : i32
  }
  func.func @transform_6(%arg0: i32) -> (i32, i32, i32) {
    %c0_i32 = arith.constant 0 : i32
    %c0_i32_0 = arith.constant 0 : i32
    %c0_i32_1 = arith.constant 0 : i32
    return %c0_i32, %arg0, %c0_i32_0 : i32, i32, i32
  }
  func.func @transform_7(%arg0: i32) -> (i32, i32, i32) {
    %c0_i32 = arith.constant 0 : i32
    %c0_i32_0 = arith.constant 0 : i32
    %c0_i32_1 = arith.constant 0 : i32
    return %c0_i32, %arg0, %c0_i32_0 : i32, i32, i32
  }
}

</mosaic_0001>

<llo_original>
// kernel: tpu_custom_call.1
$region0: #{tpu_custom_call.1}
  #allocation0 [shape = 'u32[]', space=smem, size = 0x4, offset = 0x4, fixed_abs, tag = 'smem constant byte address 0x4 - core index']
  #allocation1 [shape = 'u32[144,128]{1,0:T(1,128)}', space=vmem, size = 0x12000, scoped, tag = 'internal scratch']
  #allocation2 [shape = 'f32[1]{0:T(128)S(6)}', space=smem, size = 0x200, scoped, tag = 'scoped memory for tpu_custom_call.1']
  %s0 = inlined_call_operand.vmem [shape: f32[10,5], index: 0, kind: input, shape index: {}]
  %s1 = inlined_call_operand.vmem [shape: f32[5], index: 1, kind: input, shape index: {}]
  %s2 = inlined_call_operand.vmem [shape: f32[5,3], index: 2, kind: input, shape index: {}]
  %s3 = inlined_call_operand.vmem [shape: f32[3], index: 3, kind: input, shape index: {}]
  %s4 = inlined_call_operand.vmem [shape: f32[3,1], index: 4, kind: input, shape index: {}]
  %s5 = inlined_call_operand.<no memory space> [shape: f32[1], index: 5, kind: input, shape index: {}]
  %s6 = inlined_call_operand.hbm [shape: f32[10,8,128], index: 6, kind: input, shape index: {}]
  %s7 = inlined_call_operand.hbm [shape: f32[1,8,128], index: 7, kind: output, shape index: {}]
  %s8 = sld [smem:[#allocation0]]
  $region62: #{tpu_custom_call.1} parent=0
    _
  %s10 = ssub.s32 1, %s8
  %s11 = scalar_select 0, %s10, %s8
  %12 = sst [smem:[#allocation2]] %s5
  $region1: #{tpu_custom_call.1} parent=0
    #allocation3 [shape = 'u8[8192]{0}', space=smem, size = 0x2000, scoped, tag = 'input window, operand 0, single buffered']
    #allocation4 [shape = 's32[1]{0}', space=sflag, size = 0x4, scoped, tag = 'scoped memory for tpu_custom_call.1']
    #allocation5 [shape = 's32[1]{0}', space=sflag, size = 0x4, scoped, tag = 'scoped memory for tpu_custom_call.1']
    #allocation6 [shape = 's32[1]{0}', space=sflag, size = 0x4, scoped, tag = 'scoped memory for tpu_custom_call.1']
    #allocation7 [shape = 'u8[512]{0}', space=smem, size = 0x200, scoped, tag = 'input window, operand 1, single buffered']
    #allocation8 [shape = 's32[1]{0}', space=sflag, size = 0x4, scoped, tag = 'scoped memory for tpu_custom_call.1']
    #allocation9 [shape = 'u8[4096]{0}', space=smem, size = 0x1000, scoped, tag = 'input window, operand 2, single buffered']
    #allocation10 [shape = 'u8[512]{0}', space=smem, size = 0x200, scoped, tag = 'input window, operand 3, single buffered']
    #allocation11 [shape = 's32[1]{0}', space=sflag, size = 0x4, scoped, tag = 'scoped memory for tpu_custom_call.1']
    #allocation12 [shape = 'u8[2048]{0}', space=smem, size = 0x800, scoped, tag = 'input window, operand 4, single buffered']
    #allocation13 [shape = 'u8[40960]{0}', space=vmem, size = 0xa000, scoped, tag = 'input window, operand 6, single buffered']
    #allocation14 [shape = 'u8[4096]{0}', space=vmem, size = 0x1000, scoped, tag = 'output window, operand 0, single buffered']
    %13 = vsyncpa [#allocation6], 0
    %14 = vsyncpa [#allocation8], 0
    %15 = vsyncpa [#allocation11], 0
    %16 = vsyncpa [#allocation4], 0
    %17 = vsyncpa [#allocation5], 0
    // Predicated region
    $region2: #{tpu_custom_call.1} parent=1 // pred_check
      _
    $region3: #{tpu_custom_call.1} parent=1 // pred_check_branch
      %19 = sbr.rel (0) target = $region5
    $region4: #{tpu_custom_call.1} parent=1 // pred_region
      %s21 = ssub.s32 256, 256
      %22 = vsyncadd [#allocation6], %s21
      %s23 = sshll.u32 %s0, 4
      %s24 = int_to_ptr.vmem [resolvable:$true] %s23
      %29 = dma.vmem_to_smem %s24, 256, [#allocation3], [#allocation6], 128, 128, 8
    $region5: #{tpu_custom_call.1} parent=1 // pred_fallthru
      _
    // Predicated region
    $region6: #{tpu_custom_call.1} parent=1 // pred_check
      _
    $region7: #{tpu_custom_call.1} parent=1 // pred_check_branch
      %31 = sbr.rel (0) target = $region9
    $region8: #{tpu_custom_call.1} parent=1 // pred_region
      %s33 = ssub.s32 16, 16
      %34 = vsyncadd [#allocation8], %s33
      %s36 = sshll.u32 %s1, 4
      %s37 = int_to_ptr.vmem [resolvable:$true] %s36
      %39 = dma.vmem_to_smem %s37, 16, [#allocation7], [#allocation8]
    $region9: #{tpu_custom_call.1} parent=1 // pred_fallthru
      _
    // Predicated region
    $region10: #{tpu_custom_call.1} parent=1 // pred_check
      _
    $region11: #{tpu_custom_call.1} parent=1 // pred_check_branch
      %41 = sbr.rel (0) target = $region13
    $region12: #{tpu_custom_call.1} parent=1 // pred_region
      %s43 = ssub.s32 128, 128
      %44 = vsyncadd [#allocation8], %s43
      %s46 = sshll.u32 %s2, 4
      %s47 = int_to_ptr.vmem [resolvable:$true] %s46
      %49 = dma.vmem_to_smem %s47, 128, [#allocation9], [#allocation8]
    $region13: #{tpu_custom_call.1} parent=1 // pred_fallthru
      _
    // Predicated region
    $region14: #{tpu_custom_call.1} parent=1 // pred_check
      _
    $region15: #{tpu_custom_call.1} parent=1 // pred_check_branch
      %51 = sbr.rel (0) target = $region17
    $region16: #{tpu_custom_call.1} parent=1 // pred_region
      %s53 = ssub.s32 16, 16
      %54 = vsyncadd [#allocation11], %s53
      %s56 = sshll.u32 %s3, 4
      %s57 = int_to_ptr.vmem [resolvable:$true] %s56
      %59 = dma.vmem_to_smem %s57, 16, [#allocation10], [#allocation11]
    $region17: #{tpu_custom_call.1} parent=1 // pred_fallthru
      _
    // Predicated region
    $region18: #{tpu_custom_call.1} parent=1 // pred_check
      _
    $region19: #{tpu_custom_call.1} parent=1 // pred_check_branch
      %61 = sbr.rel (0) target = $region21
    $region20: #{tpu_custom_call.1} parent=1 // pred_region
      %s63 = ssub.s32 64, 64
      %64 = vsyncadd [#allocation11], %s63
      %s66 = sshll.u32 %s4, 4
      %s67 = int_to_ptr.vmem [resolvable:$true] %s66
      %69 = dma.vmem_to_smem %s67, 64, [#allocation12], [#allocation11]
    $region21: #{tpu_custom_call.1} parent=1 // pred_fallthru
      _
    // Predicated region
    $region22: #{tpu_custom_call.1} parent=1 // pred_check
      _
    $region23: #{tpu_custom_call.1} parent=1 // pred_check_branch
      %71 = sbr.rel (0) target = $region25
    $region24: #{tpu_custom_call.1} parent=1 // pred_region
      _
    $region25: #{tpu_custom_call.1} parent=1 // pred_fallthru
      _
    // Predicated region
    $region26: #{tpu_custom_call.1} parent=1 // pred_check
      _
    $region27: #{tpu_custom_call.1} parent=1 // pred_check_branch
      %73 = sbr.rel (0) target = $region29
    $region28: #{tpu_custom_call.1} parent=1 // pred_region
      %s75 = ssub.s32 1280, 1280
      %76 = vsyncadd [#allocation4], %s75
      %s77 = sshll.u32 [#allocation13], 4
      %s78 = int_to_ptr.vmem [resolvable:$true] %s77
      %83 = dma.hbm_to_vmem [thread:$0]  %s6, 1280, %s78, [#allocation4], 128, 128, 8
    $region29: #{tpu_custom_call.1} parent=1 // pred_fallthru
      _
    // Predicated region
    $region30: #{tpu_custom_call.1} parent=1 // pred_check
      _
    $region31: #{tpu_custom_call.1} parent=1 // pred_check_branch
      %85 = sbr.rel (0) target = $region33
    $region32: #{tpu_custom_call.1} parent=1 // pred_region
      %86 = dma.done [#allocation6], 256
    $region33: #{tpu_custom_call.1} parent=1 // pred_fallthru
      _
    // Predicated region
    $region34: #{tpu_custom_call.1} parent=1 // pred_check
      _
    $region35: #{tpu_custom_call.1} parent=1 // pred_check_branch
      %88 = sbr.rel (0) target = $region37
    $region36: #{tpu_custom_call.1} parent=1 // pred_region
      %89 = dma.done [#allocation8], 16
    $region37: #{tpu_custom_call.1} parent=1 // pred_fallthru
      _
    // Predicated region
    $region38: #{tpu_custom_call.1} parent=1 // pred_check
      _
    $region39: #{tpu_custom_call.1} parent=1 // pred_check_branch
      %91 = sbr.rel (0) target = $region41
    $region40: #{tpu_custom_call.1} parent=1 // pred_region
      %92 = dma.done [#allocation8], 128
    $region41: #{tpu_custom_call.1} parent=1 // pred_fallthru
      _
    // Predicated region
    $region42: #{tpu_custom_call.1} parent=1 // pred_check
      _
    $region43: #{tpu_custom_call.1} parent=1 // pred_check_branch
      %94 = sbr.rel (0) target = $region45
    $region44: #{tpu_custom_call.1} parent=1 // pred_region
      %95 = dma.done [#allocation11], 16
    $region45: #{tpu_custom_call.1} parent=1 // pred_fallthru
      _
    // Predicated region
    $region46: #{tpu_custom_call.1} parent=1 // pred_check
      _
    $region47: #{tpu_custom_call.1} parent=1 // pred_check_branch
      %97 = sbr.rel (0) target = $region49
    $region48: #{tpu_custom_call.1} parent=1 // pred_region
      %98 = dma.done [#allocation11], 64
    $region49: #{tpu_custom_call.1} parent=1 // pred_fallthru
      _
    // Predicated region
    $region50: #{tpu_custom_call.1} parent=1 // pred_check
      _
    $region51: #{tpu_custom_call.1} parent=1 // pred_check_branch
      %100 = sbr.rel (0) target = $region53
    $region52: #{tpu_custom_call.1} parent=1 // pred_region
      %101 = dma.done [#allocation4], 1280
    $region53: #{tpu_custom_call.1} parent=1 // pred_fallthru
      _
    %102 = sfence
    %v103 = vld [vmem:[#allocation13] sm:$0xff]
    %s104 = scalar_lea.vmem [#allocation13], 8
    %v105 = vld [vmem:[%s104] sm:$0xff]
    %s106 = scalar_lea.vmem [#allocation13], 16
    %v107 = vld [vmem:[%s106] sm:$0xff]
    %s108 = scalar_lea.vmem [#allocation13], 24
    %v109 = vld [vmem:[%s108] sm:$0xff]
    %s110 = scalar_lea.vmem [#allocation13], 32
    %v111 = vld [vmem:[%s110] sm:$0xff]
    %s112 = scalar_lea.vmem [#allocation13], 40
    %v113 = vld [vmem:[%s112] sm:$0xff]
    %s114 = scalar_lea.vmem [#allocation13], 48
    %v115 = vld [vmem:[%s114] sm:$0xff]
    %s116 = scalar_lea.vmem [#allocation13], 56
    %v117 = vld [vmem:[%s116] sm:$0xff]
    %s118 = scalar_lea.vmem [#allocation13], 64
    %v119 = vld [vmem:[%s118] sm:$0xff]
    %s120 = scalar_lea.vmem [#allocation13], 72
    %v121 = vld [vmem:[%s120] sm:$0xff]
    %s122 = sld [smem:[#allocation3]]
    %v123 = vstv %s122
    %v124 = vmul.f32 %v103, %v123
    %s125 = sld [smem:[#allocation3 + $0x80]]
    %v126 = vstv %s125
    %v127 = vmul.f32 %v105, %v126
    %s128 = sld [smem:[#allocation3 + $0x100]]
    %v129 = vstv %s128
    %v130 = vmul.f32 %v107, %v129
    %s131 = sld [smem:[#allocation3 + $0x180]]
    %v132 = vstv %s131
    %v133 = vmul.f32 %v109, %v132
    %s134 = sld [smem:[#allocation3 + $0x200]]
    %v135 = vstv %s134
    %v136 = vmul.f32 %v111, %v135
    %s137 = sld [smem:[#allocation3 + $0x280]]
    %v138 = vstv %s137
    %v139 = vmul.f32 %v113, %v138
    %s140 = sld [smem:[#allocation3 + $0x300]]
    %v141 = vstv %s140
    %v142 = vmul.f32 %v115, %v141
    %s143 = sld [smem:[#allocation3 + $0x380]]
    %v144 = vstv %s143
    %v145 = vmul.f32 %v117, %v144
    %s146 = sld [smem:[#allocation3 + $0x400]]
    %v147 = vstv %s146
    %v148 = vmul.f32 %v119, %v147
    %s149 = sld [smem:[#allocation3 + $0x480]]
    %v150 = vstv %s149
    %v151 = vmul.f32 %v121, %v150
    %v152 = vadd.f32 %v124, %v127
    %v153 = vadd.f32 %v130, %v133
    %v154 = vadd.f32 %v136, %v139
    %v155 = vadd.f32 %v142, %v145
    %v156 = vadd.f32 %v148, %v151
    %v157 = vadd.f32 %v152, %v153
    %v158 = vadd.f32 %v154, %v155
    %v159 = vadd.f32 %v157, %v158
    %v160 = vadd.f32 %v159, %v156
    %s161 = sld [smem:[#allocation7]]
    %v162 = vstv %s161
    %v163 = vadd.f32 %v160, %v162
    %v164 = vmax.f32 %v163, 0.0
    %s165 = sld [smem:[#allocation3 + $0x1]]
    %v166 = vstv %s165
    %v167 = vmul.f32 %v103, %v166
    %s168 = sld [smem:[#allocation3 + $0x81]]
    %v169 = vstv %s168
    %v170 = vmul.f32 %v105, %v169
    %s171 = sld [smem:[#allocation3 + $0x101]]
    %v172 = vstv %s171
    %v173 = vmul.f32 %v107, %v172
    %s174 = sld [smem:[#allocation3 + $0x181]]
    %v175 = vstv %s174
    %v176 = vmul.f32 %v109, %v175
    %s177 = sld [smem:[#allocation3 + $0x201]]
    %v178 = vstv %s177
    %v179 = vmul.f32 %v111, %v178
    %s180 = sld [smem:[#allocation3 + $0x281]]
    %v181 = vstv %s180
    %v182 = vmul.f32 %v113, %v181
    %s183 = sld [smem:[#allocation3 + $0x301]]
    %v184 = vstv %s183
    %v185 = vmul.f32 %v115, %v184
    %s186 = sld [smem:[#allocation3 + $0x381]]
    %v187 = vstv %s186
    %v188 = vmul.f32 %v117, %v187
    %s189 = sld [smem:[#allocation3 + $0x401]]
    %v190 = vstv %s189
    %v191 = vmul.f32 %v119, %v190
    %s192 = sld [smem:[#allocation3 + $0x481]]
    %v193 = vstv %s192
    %v194 = vmul.f32 %v121, %v193
    %v195 = vadd.f32 %v167, %v170
    %v196 = vadd.f32 %v173, %v176
    %v197 = vadd.f32 %v179, %v182
    %v198 = vadd.f32 %v185, %v188
    %v199 = vadd.f32 %v191, %v194
    %v200 = vadd.f32 %v195, %v196
    %v201 = vadd.f32 %v197, %v198
    %v202 = vadd.f32 %v200, %v201
    %v203 = vadd.f32 %v202, %v199
    %s204 = sld [smem:[#allocation7 + $0x1]]
    %v205 = vstv %s204
    %v206 = vadd.f32 %v203, %v205
    %v207 = vmax.f32 %v206, 0.0
    %s208 = sld [smem:[#allocation3 + $0x2]]
    %v209 = vstv %s208
    %v210 = vmul.f32 %v103, %v209
    %s211 = sld [smem:[#allocation3 + $0x82]]
    %v212 = vstv %s211
    %v213 = vmul.f32 %v105, %v212
    %s214 = sld [smem:[#allocation3 + $0x102]]
    %v215 = vstv %s214
    %v216 = vmul.f32 %v107, %v215
    %s217 = sld [smem:[#allocation3 + $0x182]]
    %v218 = vstv %s217
    %v219 = vmul.f32 %v109, %v218
    %s220 = sld [smem:[#allocation3 + $0x202]]
    %v221 = vstv %s220
    %v222 = vmul.f32 %v111, %v221
    %s223 = sld [smem:[#allocation3 + $0x282]]
    %v224 = vstv %s223
    %v225 = vmul.f32 %v113, %v224
    %s226 = sld [smem:[#allocation3 + $0x302]]
    %v227 = vstv %s226
    %v228 = vmul.f32 %v115, %v227
    %s229 = sld [smem:[#allocation3 + $0x382]]
    %v230 = vstv %s229
    %v231 = vmul.f32 %v117, %v230
    %s232 = sld [smem:[#allocation3 + $0x402]]
    %v233 = vstv %s232
    %v234 = vmul.f32 %v119, %v233
    %s235 = sld [smem:[#allocation3 + $0x482]]
    %v236 = vstv %s235
    %v237 = vmul.f32 %v121, %v236
    %v238 = vadd.f32 %v210, %v213
    %v239 = vadd.f32 %v216, %v219
    %v240 = vadd.f32 %v222, %v225
    %v241 = vadd.f32 %v228, %v231
    %v242 = vadd.f32 %v234, %v237
    %v243 = vadd.f32 %v238, %v239
    %v244 = vadd.f32 %v240, %v241
    %v245 = vadd.f32 %v243, %v244
    %v246 = vadd.f32 %v245, %v242
    %s247 = sld [smem:[#allocation7 + $0x2]]
    %v248 = vstv %s247
    %v249 = vadd.f32 %v246, %v248
    %v250 = vmax.f32 %v249, 0.0
    %s251 = sld [smem:[#allocation3 + $0x3]]
    %v252 = vstv %s251
    %v253 = vmul.f32 %v103, %v252
    %s254 = sld [smem:[#allocation3 + $0x83]]
    %v255 = vstv %s254
    %v256 = vmul.f32 %v105, %v255
    %s257 = sld [smem:[#allocation3 + $0x103]]
    %v258 = vstv %s257
    %v259 = vmul.f32 %v107, %v258
    %s260 = sld [smem:[#allocation3 + $0x183]]
    %v261 = vstv %s260
    %v262 = vmul.f32 %v109, %v261
    %s263 = sld [smem:[#allocation3 + $0x203]]
    %v264 = vstv %s263
    %v265 = vmul.f32 %v111, %v264
    %s266 = sld [smem:[#allocation3 + $0x283]]
    %v267 = vstv %s266
    %v268 = vmul.f32 %v113, %v267
    %s269 = sld [smem:[#allocation3 + $0x303]]
    %v270 = vstv %s269
    %v271 = vmul.f32 %v115, %v270
    %s272 = sld [smem:[#allocation3 + $0x383]]
    %v273 = vstv %s272
    %v274 = vmul.f32 %v117, %v273
    %s275 = sld [smem:[#allocation3 + $0x403]]
    %v276 = vstv %s275
    %v277 = vmul.f32 %v119, %v276
    %s278 = sld [smem:[#allocation3 + $0x483]]
    %v279 = vstv %s278
    %v280 = vmul.f32 %v121, %v279
    %v281 = vadd.f32 %v253, %v256
    %v282 = vadd.f32 %v259, %v262
    %v283 = vadd.f32 %v265, %v268
    %v284 = vadd.f32 %v271, %v274
    %v285 = vadd.f32 %v277, %v280
    %v286 = vadd.f32 %v281, %v282
    %v287 = vadd.f32 %v283, %v284
    %v288 = vadd.f32 %v286, %v287
    %v289 = vadd.f32 %v288, %v285
    %s290 = sld [smem:[#allocation7 + $0x3]]
    %v291 = vstv %s290
    %v292 = vadd.f32 %v289, %v291
    %v293 = vmax.f32 %v292, 0.0
    %s294 = sld [smem:[#allocation3 + $0x4]]
    %v295 = vstv %s294
    %v296 = vmul.f32 %v103, %v295
    %s297 = sld [smem:[#allocation3 + $0x84]]
    %v298 = vstv %s297
    %v299 = vmul.f32 %v105, %v298
    %s300 = sld [smem:[#allocation3 + $0x104]]
    %v301 = vstv %s300
    %v302 = vmul.f32 %v107, %v301
    %s303 = sld [smem:[#allocation3 + $0x184]]
    %v304 = vstv %s303
    %v305 = vmul.f32 %v109, %v304
    %s306 = sld [smem:[#allocation3 + $0x204]]
    %v307 = vstv %s306
    %v308 = vmul.f32 %v111, %v307
    %s309 = sld [smem:[#allocation3 + $0x284]]
    %v310 = vstv %s309
    %v311 = vmul.f32 %v113, %v310
    %s312 = sld [smem:[#allocation3 + $0x304]]
    %v313 = vstv %s312
    %v314 = vmul.f32 %v115, %v313
    %s315 = sld [smem:[#allocation3 + $0x384]]
    %v316 = vstv %s315
    %v317 = vmul.f32 %v117, %v316
    %s318 = sld [smem:[#allocation3 + $0x404]]
    %v319 = vstv %s318
    %v320 = vmul.f32 %v119, %v319
    %s321 = sld [smem:[#allocation3 + $0x484]]
    %v322 = vstv %s321
    %v323 = vmul.f32 %v121, %v322
    %v324 = vadd.f32 %v296, %v299
    %v325 = vadd.f32 %v302, %v305
    %v326 = vadd.f32 %v308, %v311
    %v327 = vadd.f32 %v314, %v317
    %v328 = vadd.f32 %v320, %v323
    %v329 = vadd.f32 %v324, %v325
    %v330 = vadd.f32 %v326, %v327
    %v331 = vadd.f32 %v329, %v330
    %v332 = vadd.f32 %v331, %v328
    %s333 = sld [smem:[#allocation7 + $0x4]]
    %v334 = vstv %s333
    %v335 = vadd.f32 %v332, %v334
    %v336 = vmax.f32 %v335, 0.0
    %s337 = sld [smem:[#allocation9]]
    %v338 = vstv %s337
    %v339 = vmul.f32 %v164, %v338
    %s340 = sld [smem:[#allocation9 + $0x80]]
    %v341 = vstv %s340
    %v342 = vmul.f32 %v207, %v341
    %s343 = sld [smem:[#allocation9 + $0x100]]
    %v344 = vstv %s343
    %v345 = vmul.f32 %v250, %v344
    %s346 = sld [smem:[#allocation9 + $0x180]]
    %v347 = vstv %s346
    %v348 = vmul.f32 %v293, %v347
    %s349 = sld [smem:[#allocation9 + $0x200]]
    %v350 = vstv %s349
    %v351 = vmul.f32 %v336, %v350
    %v352 = vadd.f32 %v339, %v342
    %v353 = vadd.f32 %v345, %v348
    %v354 = vadd.f32 %v352, %v353
    %v355 = vadd.f32 %v354, %v351
    %s356 = sld [smem:[#allocation10]]
    %v357 = vstv %s356
    %v358 = vadd.f32 %v355, %v357
    %v359 = vmax.f32 %v358, 0.0
    %s360 = sld [smem:[#allocation9 + $0x1]]
    %v361 = vstv %s360
    %v362 = vmul.f32 %v164, %v361
    %s363 = sld [smem:[#allocation9 + $0x81]]
    %v364 = vstv %s363
    %v365 = vmul.f32 %v207, %v364
    %s366 = sld [smem:[#allocation9 + $0x101]]
    %v367 = vstv %s366
    %v368 = vmul.f32 %v250, %v367
    %s369 = sld [smem:[#allocation9 + $0x181]]
    %v370 = vstv %s369
    %v371 = vmul.f32 %v293, %v370
    %s372 = sld [smem:[#allocation9 + $0x201]]
    %v373 = vstv %s372
    %v374 = vmul.f32 %v336, %v373
    %v375 = vadd.f32 %v362, %v365
    %v376 = vadd.f32 %v368, %v371
    %v377 = vadd.f32 %v375, %v376
    %v378 = vadd.f32 %v377, %v374
    %s379 = sld [smem:[#allocation10 + $0x1]]
    %v380 = vstv %s379
    %v381 = vadd.f32 %v378, %v380
    %v382 = vmax.f32 %v381, 0.0
    %s383 = sld [smem:[#allocation9 + $0x2]]
    %v384 = vstv %s383
    %v385 = vmul.f32 %v164, %v384
    %s386 = sld [smem:[#allocation9 + $0x82]]
    %v387 = vstv %s386
    %v388 = vmul.f32 %v207, %v387
    %s389 = sld [smem:[#allocation9 + $0x102]]
    %v390 = vstv %s389
    %v391 = vmul.f32 %v250, %v390
    %s392 = sld [smem:[#allocation9 + $0x182]]
    %v393 = vstv %s392
    %v394 = vmul.f32 %v293, %v393
    %s395 = sld [smem:[#allocation9 + $0x202]]
    %v396 = vstv %s395
    %v397 = vmul.f32 %v336, %v396
    %v398 = vadd.f32 %v385, %v388
    %v399 = vadd.f32 %v391, %v394
    %v400 = vadd.f32 %v398, %v399
    %v401 = vadd.f32 %v400, %v397
    %s402 = sld [smem:[#allocation10 + $0x2]]
    %v403 = vstv %s402
    %v404 = vadd.f32 %v401, %v403
    %v405 = vmax.f32 %v404, 0.0
    %s406 = sld [smem:[#allocation12]]
    %v407 = vstv %s406
    %v408 = vmul.f32 %v359, %v407
    %s409 = sld [smem:[#allocation12 + $0x80]]
    %v410 = vstv %s409
    %v411 = vmul.f32 %v382, %v410
    %s412 = sld [smem:[#allocation12 + $0x100]]
    %v413 = vstv %s412
    %v414 = vmul.f32 %v405, %v413
    %v415 = vadd.f32 %v408, %v411
    %v416 = vadd.f32 %v415, %v414
    %s417 = sld [smem:[#allocation2]]
    %v418 = vstv %s417
    %v419 = vadd.f32 %v416, %v418
    %420 = vst [vmem:[#allocation14] sm:$0xff] %v419
    // Predicated region
    $region54: #{tpu_custom_call.1} parent=1 // pred_check
      _
    $region55: #{tpu_custom_call.1} parent=1 // pred_check_branch
      %422 = sbr.rel (0) target = $region57
    $region56: #{tpu_custom_call.1} parent=1 // pred_region
      %s424 = ssub.s32 128, 128
      %425 = vsyncadd [#allocation5], %s424
      %s427 = sshll.u32 [#allocation14], 4
      %s428 = int_to_ptr.vmem [resolvable:$true] %s427
      %430 = dma.vmem_to_hbm [thread:$0]  %s428, 128, %s7, [#allocation5]
    $region57: #{tpu_custom_call.1} parent=1 // pred_fallthru
      _
    // Predicated region
    $region58: #{tpu_custom_call.1} parent=1 // pred_check
      _
    $region59: #{tpu_custom_call.1} parent=1 // pred_check_branch
      %432 = sbr.rel (0) target = $region61
    $region60: #{tpu_custom_call.1} parent=1 // pred_region
      %433 = dma.done [#allocation5], 128
    $region61: #{tpu_custom_call.1} parent=1 // pred_fallthru
      _
    %434 = vsyncpa [#allocation4], 1
    %435 = vsyncpa [#allocation5], 1
    %436 = vsyncpa [#allocation6], 1
    %437 = vsyncpa [#allocation8], 1
    %438 = vsyncpa [#allocation11], 1

</llo_original>
